<compile_context>
chip_gen: v7x
topology: tpu7x:2x2x1
jax: 0.10.0
libtpu: 0.0.40
codegen_flags: <defaults>
</compile_context>

<pallas_src>
import functools

import jax
import jax.numpy as jnp
from jax.experimental import pallas as pl
from jax.experimental.pallas import tpu as pltpu


_VMEM_LIMIT = 64 * 1024 * 1024


def _round_up(a, b):
    return (a + b - 1) // b * b


# ----------------------------- kernels --------------------------------------

def _gemm_kernel(x_ref, w_ref, o_ref):
    # (tm, K) @ (K, Nout) -> (tm, Nout).  Weight is already K-major (pre-
    # transposed in the wrapper), so no in-kernel transpose / XLU relayout.
    o_ref[...] = jnp.dot(
        x_ref[...], w_ref[...], preferred_element_type=jnp.float32
    ).astype(o_ref.dtype)


def _gemm_bias_kernel(x_ref, w_ref, b_ref, o_ref):
    acc = jnp.dot(x_ref[...], w_ref[...], preferred_element_type=jnp.float32)
    o_ref[...] = (acc + b_ref[...]).astype(o_ref.dtype)


def _attn_head_kernel(q_ref, k_ref, v_ref, o_ref, *, scale, n_valid):
    # One (batch, head) tile per grid step: refs are (1, 1, N_pad, hd) bf16.
    q = q_ref[...][0, 0]                     # (N_pad, hd)
    k = k_ref[...][0, 0]
    v = v_ref[...][0, 0]

    # q @ k^T via NT dimension numbers (contraction folded into the MXU fetch,
    # no materialized transpose), f32 accumulation.
    s = jax.lax.dot_general(
        q, k, (((1,), (1,)), ((), ())), preferred_element_type=jnp.float32
    ) * scale

    n_pad = s.shape[-1]
    if n_pad > n_valid:                      # mask padded key columns (static)
        key_idx = jax.lax.broadcasted_iota(jnp.int32, s.shape, 1)
        s = jnp.where(key_idx >= n_valid, -1e30, s)

    # softmax kept in f32
    m = jnp.max(s, axis=-1, keepdims=True)
    e = jnp.exp(s - m)
    p = e * pl.reciprocal(jnp.sum(e, axis=-1, keepdims=True), approx=True)

    o = jnp.dot(p.astype(v.dtype), v, preferred_element_type=jnp.float32)
    o_ref[...] = o[None, None, :, :].astype(o_ref.dtype)


# ----------------------------- wrapper ---------------------------------------

def multihead_attention(x, w_qkv, w_proj, b_proj, *, num_heads):
    """ViT MultiHead_Attention forward. x: (B, N, C); PyTorch Linear weights."""
    B, N, C = x.shape
    H = num_heads
    hd = C // H
    scale = hd ** (-0.5)
    out_dtype = x.dtype

    # ---- host-side prep: bf16 cast, pre-transposed (K-major) weights, padding
    n_pad = _round_up(N, 16)                 # bf16 sublane packing
    m_rows = B * n_pad
    tile_m = min(256, m_rows)
    m_pad = _round_up(m_rows, tile_m)
    n_tiles_m = m_pad // tile_m

    xb = x.astype(jnp.bfloat16)
    if n_pad != N:
        xb = jnp.pad(xb, ((0, 0), (0, n_pad - N), (0, 0)))
    x_flat = xb.reshape(m_rows, C)
    if m_pad != m_rows:
        x_flat = jnp.pad(x_flat, ((0, m_pad - m_rows), (0, 0)))

    w_qkv_t = jnp.transpose(w_qkv).astype(jnp.bfloat16)     # (C, 3C)
    w_proj_t = jnp.transpose(w_proj).astype(jnp.bfloat16)   # (C, C)
    b_proj2 = b_proj.reshape(1, C).astype(jnp.float32)

    gemm_params = pltpu.CompilerParams(
        dimension_semantics=("parallel",),
        vmem_limit_bytes=_VMEM_LIMIT,
    )

    # ---- 1) QKV projection over all B*N rows (large-M bf16 GEMM) -------------
    qkv_flat = pl.pallas_call(
        _gemm_kernel,
        out_shape=jax.ShapeDtypeStruct((m_pad, 3 * C), jnp.bfloat16),
        grid_spec=pltpu.PrefetchScalarGridSpec(
            num_scalar_prefetch=0,
            grid=(n_tiles_m,),
            in_specs=[
                pl.BlockSpec((tile_m, C), lambda i: (i, 0)),       # x rows
                pl.BlockSpec((C, 3 * C), lambda i: (0, 0)),        # W_qkv^T resident
            ],
            out_specs=pl.BlockSpec((tile_m, 3 * C), lambda i: (i, 0)),
        ),
        compiler_params=gemm_params,
    )(x_flat, w_qkv_t)

    # One-time XLA relayout (outside the kernels, not per grid step):
    # (B, N_pad, 3, H, hd) -> (3, B, H, N_pad, hd)
    qkv = qkv_flat[:m_rows].reshape(B, n_pad, 3, H, hd).transpose(2, 0, 3, 1, 4)
    q, k, v = qkv[0], qkv[1], qkv[2]          # each (B, H, N_pad, hd) bf16

    # ---- 2) attention core: one (batch, head) per step, both axes parallel ---
    attn_kernel = functools.partial(_attn_head_kernel, scale=scale, n_valid=N)
    head_spec = pl.BlockSpec((1, 1, n_pad, hd), lambda b, h: (b, h, 0, 0))
    attn_out = pl.pallas_call(
        attn_kernel,
        out_shape=jax.ShapeDtypeStruct((B, H, n_pad, hd), jnp.bfloat16),
        grid_spec=pltpu.PrefetchScalarGridSpec(
            num_scalar_prefetch=0,
            grid=(B, H),
            in_specs=[head_spec, head_spec, head_spec],
            out_specs=head_spec,
        ),
        compiler_params=pltpu.CompilerParams(
            dimension_semantics=("parallel", "parallel"),
            vmem_limit_bytes=_VMEM_LIMIT,
        ),
    )(q, k, v)

    # ---- 3) output projection over all B*N rows (+ bias) ---------------------
    ao = attn_out.transpose(0, 2, 1, 3).reshape(m_rows, C)   # (B*N_pad, C)
    if m_pad != m_rows:
        ao = jnp.pad(ao, ((0, m_pad - m_rows), (0, 0)))

    y = pl.pallas_call(
        _gemm_bias_kernel,
        out_shape=jax.ShapeDtypeStruct((m_pad, C), jnp.float32),
        grid_spec=pltpu.PrefetchScalarGridSpec(
            num_scalar_prefetch=0,
            grid=(n_tiles_m,),
            in_specs=[
                pl.BlockSpec((tile_m, C), lambda i: (i, 0)),       # attn rows
                pl.BlockSpec((C, C), lambda i: (0, 0)),            # W_proj^T resident
                pl.BlockSpec((1, C), lambda i: (0, 0)),            # bias resident
            ],
            out_specs=pl.BlockSpec((tile_m, C), lambda i: (i, 0)),
        ),
        compiler_params=gemm_params,
    )(ao, w_proj_t, b_proj2)

    y = y[:m_rows].reshape(B, n_pad, C)[:, :N, :]
    return y.astype(out_dtype)


# ----------------------------- reference -------------------------------------

def reference_mha(x, w_qkv, w_proj, b_proj, *, num_heads):
    B, N, C = x.shape
    hd = C // num_heads
    scale = hd ** (-0.5)
    qkv = jnp.einsum('bnc,oc->bno', x, w_qkv)                 # (B, N, 3C)
    qkv = qkv.reshape(B, N, 3, num_heads, hd).transpose(2, 0, 3, 1, 4)
    q, k, v = qkv[0], qkv[1], qkv[2]                          # (B, H, N, hd)
    attn = jnp.einsum('bhnd,bhmd->bhnm', q, k) * scale
    attn = jax.nn.softmax(attn, axis=-1)
    out = jnp.einsum('bhnm,bhmd->bhnd', attn, v)
    out = out.transpose(0, 2, 1, 3).reshape(B, N, C)
    return jnp.einsum('bnc,oc->bno', out, w_proj) + b_proj


if __name__ == "__main__":
    # small shapes consistent with the module: dim=64, num_heads=8 -> head_dim=8
    B, N, C, H = 2, 16, 64, 8

    key = jax.random.PRNGKey(0)
    kx, kqkv, kproj, kb = jax.random.split(key, 4)

    x = jax.random.normal(kx, (B, N, C), dtype=jnp.float32)
    w_qkv = jax.random.normal(kqkv, (3 * C, C), dtype=jnp.float32) * 0.05
    w_proj = jax.random.normal(kproj, (C, C), dtype=jnp.float32) * 0.05
    b_proj = jax.random.normal(kb, (C,), dtype=jnp.float32) * 0.05

    out = multihead_attention(x, w_qkv, w_proj, b_proj, num_heads=H)
    out = jax.block_until_ready(out)

    ref = reference_mha(x, w_qkv, w_proj, b_proj, num_heads=H)
    assert out.shape == (B, N, C)
    max_err = float(jnp.max(jnp.abs(out - ref)))
    # bf16 matmuls vs. pure-f32 reference -> relaxed tolerance
    assert max_err < 2e-2, f"mismatch vs reference: max abs err {max_err}"

    print("KERNEL_OK")
</pallas_src>

<mosaic_0001>
module attributes {stable_mosaic.version = 11 : i64} {
  func.func @_gemm_kernel(%arg0: i32, %arg1: memref<32x64xbf16, #tpu.memory_space<vmem>>, %arg2: memref<64x192xbf16, #tpu.memory_space<vmem>>, %arg3: memref<32x192xbf16, #tpu.memory_space<vmem>>) attributes {dimension_semantics = [#tpu.dimension_semantics<parallel>], iteration_bounds = array<i64: 1>, scalar_prefetch = 0 : i64, scratch_operands = 0 : i64, tpu.core_type = #tpu.core_type<tc>, window_params = [{transform_indices = @transform_0, window_bounds = array<i64: 32, 64>}, {pipeline_mode = #tpu.pipeline_mode<synchronous>, transform_indices = @transform_1, window_bounds = array<i64: 64, 192>}, {transform_indices = @transform_2, window_bounds = array<i64: 32, 192>}]} {
    %c0 = arith.constant 0 : index
    %c0_0 = arith.constant 0 : index
    %0 = vector.load %arg1[%c0, %c0_0] : memref<32x64xbf16, #tpu.memory_space<vmem>>, vector<32x64xbf16>
    %c0_1 = arith.constant 0 : index
    %c0_2 = arith.constant 0 : index
    %1 = vector.load %arg2[%c0_1, %c0_2] : memref<64x192xbf16, #tpu.memory_space<vmem>>, vector<64x192xbf16>
    %cst = arith.constant dense<0.000000e+00> : vector<32x192xf32>
    %2 = tpu.matmul %0, %1, %cst {dimension_numbers = #tpu.dot_dimension_numbers<[1], [0], [0], [1], [0, 0, 1, 1], [], []>} : vector<32x64xbf16>, vector<64x192xbf16>, vector<32x192xf32> -> vector<32x192xf32>
    %3 = arith.truncf %2 : vector<32x192xf32> to vector<32x192xbf16>
    %c0_3 = arith.constant 0 : index
    %c0_4 = arith.constant 0 : index
    %4 = vector.load %arg3[%c0_3, %c0_4] : memref<32x192xbf16, #tpu.memory_space<vmem>>, vector<32x192xbf16>
    tpu.vector_store %arg3[%c0_3, %c0_4], %3 {strides = array<i32>} : memref<32x192xbf16, #tpu.memory_space<vmem>>, vector<32x192xbf16>,
    return
  }
  func.func @transform_0(%arg0: i32) -> (i32, i32) {
    %c0_i32 = arith.constant 0 : i32
    %c0_i32_0 = arith.constant 0 : i32
    return %arg0, %c0_i32 : i32, i32
  }
  func.func @transform_1(%arg0: i32) -> (i32, i32) {
    %c0_i32 = arith.constant 0 : i32
    %c0_i32_0 = arith.constant 0 : i32
    %c0_i32_1 = arith.constant 0 : i32
    return %c0_i32, %c0_i32_0 : i32, i32
  }
  func.func @transform_2(%arg0: i32) -> (i32, i32) {
    %c0_i32 = arith.constant 0 : i32
    %c0_i32_0 = arith.constant 0 : i32
    return %arg0, %c0_i32 : i32, i32
  }
}

</mosaic_0001>

<llo_original>
// kernel: tpu_custom_call.1
$region0: #{tpu_custom_call.1}
  #allocation0 [shape = 'u32[]', space=smem, size = 0x4, offset = 0x4, fixed_abs, tag = 'smem constant byte address 0x4 - core index']
  #allocation1 [shape = 'u32[144,128]{1,0:T(1,128)}', space=vmem, size = 0x12000, scoped, tag = 'internal scratch']
  %s0 = inlined_call_operand.hbm [shape: bf16[32,64], index: 0, kind: input, shape index: {}]
  %s1 = inlined_call_operand.hbm [shape: bf16[64,192], index: 1, kind: input, shape index: {}]
  %s2 = inlined_call_operand.hbm [shape: bf16[32,192], index: 2, kind: output, shape index: {}]
  %s3 = sld [smem:[#allocation0]]
  $region26: #{tpu_custom_call.1} parent=0
    _
  %s5 = ssub.s32 1, %s3
  %s6 = scalar_select 0, %s5, %s3
  $region1: #{tpu_custom_call.1} parent=0
    #allocation2 [shape = 'u8[8192]{0}', space=vmem, size = 0x2000, scoped, tag = 'input window, operand 0, single buffered']
    #allocation3 [shape = 's32[1]{0}', space=sflag, size = 0x4, scoped, tag = 'scoped memory for tpu_custom_call.1']
    #allocation4 [shape = 's32[1]{0}', space=sflag, size = 0x4, scoped, tag = 'scoped memory for tpu_custom_call.1']
    #allocation5 [shape = 'u8[32768]{0}', space=vmem, size = 0x8000, scoped, tag = 'input window, operand 1, single buffered']
    #allocation6 [shape = 's32[1]{0}', space=sflag, size = 0x4, scoped, tag = 'scoped memory for tpu_custom_call.1']
    #allocation7 [shape = 'u8[16384]{0}', space=vmem, size = 0x4000, scoped, tag = 'output window, operand 0, single buffered']
    %7 = vsyncpa [#allocation3], 0
    %8 = vsyncpa [#allocation6], 0
    %9 = vsyncpa [#allocation4], 0
    // Predicated region
    $region2: #{tpu_custom_call.1} parent=1 // pred_check
      _
    $region3: #{tpu_custom_call.1} parent=1 // pred_check_branch
      %11 = sbr.rel (0) target = $region5
    $region4: #{tpu_custom_call.1} parent=1 // pred_region
      %s13 = ssub.s32 256, 256
      %14 = vsyncadd [#allocation3], %s13
      %s15 = sshll.u32 [#allocation2], 4
      %s16 = int_to_ptr.vmem [resolvable:$true] %s15
      %21 = dma.hbm_to_vmem [thread:$0]  %s0, 256, %s16, [#allocation3], 64, 64, 4
    $region5: #{tpu_custom_call.1} parent=1 // pred_fallthru
      _
    // Predicated region
    $region6: #{tpu_custom_call.1} parent=1 // pred_check
      _
    $region7: #{tpu_custom_call.1} parent=1 // pred_check_branch
      %23 = sbr.rel (0) target = $region9
    $region8: #{tpu_custom_call.1} parent=1 // pred_region
      %s25 = ssub.s32 1024, 1024
      %26 = vsyncadd [#allocation6], %s25
      %s27 = sshll.u32 [#allocation5], 4
      %s28 = int_to_ptr.vmem [resolvable:$true] %s27
      %33 = dma.hbm_to_vmem [thread:$0]  %s1, 1024, %s28, [#allocation6], 128, 128, 8
    $region9: #{tpu_custom_call.1} parent=1 // pred_fallthru
      _
    // Predicated region
    $region10: #{tpu_custom_call.1} parent=1 // pred_check
      _
    $region11: #{tpu_custom_call.1} parent=1 // pred_check_branch
      %35 = sbr.rel (0) target = $region13
    $region12: #{tpu_custom_call.1} parent=1 // pred_region
      %36 = dma.done [#allocation3], 256
    $region13: #{tpu_custom_call.1} parent=1 // pred_fallthru
      _
    // Predicated region
    $region14: #{tpu_custom_call.1} parent=1 // pred_check
      _
    $region15: #{tpu_custom_call.1} parent=1 // pred_check_branch
      %38 = sbr.rel (0) target = $region17
    $region16: #{tpu_custom_call.1} parent=1 // pred_region
      %39 = dma.done [#allocation6], 1024
    $region17: #{tpu_custom_call.1} parent=1 // pred_fallthru
      _
    %v41 = vld [vmem:[#allocation2] sm:$0xf]
    %v42 = vld [vmem:[#allocation2 + $0x4] sm:$0xf]
    %v43 = vld [vmem:[#allocation2 + $0x8] sm:$0xf]
    %v44 = vld [vmem:[#allocation2 + $0xc] sm:$0xf]
    %v45 = vld [vmem:[#allocation5] sm:$0xff]
    %v46 = vld [vmem:[#allocation5 + $0x8] sm:$0xff]
    %v47 = vld [vmem:[#allocation5 + $0x10] sm:$0xff]
    %v48 = vld [vmem:[#allocation5 + $0x18] sm:$0xff]
    %v49 = vld [vmem:[#allocation5 + $0x20] sm:$0xff]
    %v50 = vld [vmem:[#allocation5 + $0x28] sm:$0xff]
    %v51 = vld [vmem:[#allocation5 + $0x30] sm:$0xff]
    %v52 = vld [vmem:[#allocation5 + $0x38] sm:$0xff]
    %v57 = vunpack.c.l.b16 %v41
    %v58 = vunpack.c.l.b16 %v42
    %v59 = vunpack.c.l.b16 %v43
    %v60 = vunpack.c.l.b16 %v44
    %v61 = vpack.c.b16 %v58, %v57
    %v62 = vpack.c.b16 %v60, %v59
    %v71 = vunpack.c.l.b16 %v45
    %v72 = vunpack.c.h.b16 %v45
    %v73 = vunpack.c.l.b16 %v46
    %v74 = vunpack.c.h.b16 %v46
    %v75 = vunpack.c.l.b16 %v47
    %v76 = vunpack.c.h.b16 %v47
    %v77 = vunpack.c.l.b16 %v48
    %v78 = vunpack.c.h.b16 %v48
    %v79 = vunpack.c.l.b16 %v49
    %v80 = vunpack.c.h.b16 %v49
    %v81 = vunpack.c.l.b16 %v50
    %v82 = vunpack.c.h.b16 %v50
    %v83 = vunpack.c.l.b16 %v51
    %v84 = vunpack.c.h.b16 %v51
    %v85 = vunpack.c.l.b16 %v52
    %v86 = vunpack.c.h.b16 %v52
    %v87 = vpack.c.b16 %v73, %v71
    %v88 = vpack.c.b16 %v74, %v72
    %v89 = vpack.c.b16 %v77, %v75
    %v90 = vpack.c.b16 %v78, %v76
    %v91 = vpack.c.b16 %v81, %v79
    %v92 = vpack.c.b16 %v82, %v80
    %v93 = vpack.c.b16 %v85, %v83
    %v94 = vpack.c.b16 %v86, %v84
    %vm103 = vcmask 523264
    %v105 = vsel %vm103, %v61, 0
    %v108 = vsel %vm103, %v62, 0
    %110 = vmatprep.subr.bf16.mxu0 %v88
    %111 = vmatpush1.bf16.msra.mxu0 %v87
    %112 = vmatprep.subr.bf16.mxu0 %v90
    %113 = vmatpush1.bf16.msra.mxu0 %v89
    %114 = vmatprep.subr.bf16.mxu0 %v92
    %115 = vmatpush1.bf16.msra.mxu0 %v91
    %116 = vmatprep.subr.bf16.mxu0 %v94
    %117 = vmatpush1.bf16.msra.mxu0 %v93
    %118 = vmatprep.subr.bf16.mxu0 0
    %119 = vmatpush1.bf16.msra.mxu0 0
    %120 = vmatprep.subr.bf16.mxu0 0
    %121 = vmatpush1.bf16.msra.mxu0 0
    %122 = vmatprep.subr.bf16.mxu0 0
    %123 = vmatpush1.bf16.msra.mxu0 0
    %124 = vmatprep.subr.bf16.mxu0 0
    %125 = vmatpush1.bf16.msra.mxu0 0
    %126 = vmatprep.subr.bf16.mxu0 0
    %127 = vmatpush1.bf16.msra.mxu0 0
    %128 = vmatprep.subr.bf16.mxu0 0
    %129 = vmatpush1.bf16.msra.mxu0 0
    %130 = vmatprep.subr.bf16.mxu0 0
    %131 = vmatpush1.bf16.msra.mxu0 0
    %132 = vmatprep.subr.bf16.mxu0 0
    %133 = vmatpush1.bf16.msra.mxu0 0
    %134 = vmatprep.subr.bf16.mxu0 0
    %135 = vmatpush1.bf16.msra.mxu0 0
    %136 = vmatprep.subr.bf16.mxu0 0
    %137 = vmatpush1.bf16.msra.mxu0 0
    %138 = vmatprep.subr.bf16.mxu0 0
    %139 = vmatpush1.bf16.msra.mxu0 0
    %140 = vmatprep.subr.bf16.mxu0 0
    %141 = vmatpush1.bf16.msra.mxu0 0
    %142 = vmatprep.mubr.bf16.mxu0 0
    %143 = vmatmul.mubr.bf16.gmra.mrb[0].mxu0 %v105
    %v144 = vpop.f32.mrb[0].mxu0
    %v145 = vadd.f32 0.0, %v144
    %v146 = vpop.f32.mrb[0].mxu0
    %v147 = vadd.f32 0.0, %v146
    %v148 = vpop.f32.mrb[0].mxu0
    %v149 = vadd.f32 0.0, %v148
    %v150 = vpop.f32.mrb[0].mxu0
    %v151 = vadd.f32 0.0, %v150
    %152 = vmatprep.mubr.bf16.mxu0 0
    %153 = vmatmul.mubr.bf16.gmra.mrb[0].mxu0 %v108
    %v154 = vpop.f32.mrb[0].mxu0
    %v155 = vadd.f32 0.0, %v154
    %v156 = vpop.f32.mrb[0].mxu0
    %v157 = vadd.f32 0.0, %v156
    %v158 = vpop.f32.mrb[0].mxu0
    %v159 = vadd.f32 0.0, %v158
    %v160 = vpop.f32.mrb[0].mxu0
    %v161 = vadd.f32 0.0, %v160
    %162 = vdwg.mxu0
    %v163 = vpack.c.bf16 %v149, %v145
    %v164 = vpack.c.bf16 %v151, %v147
    %v165 = vpack.c.bf16 %v159, %v155
    %v166 = vpack.c.bf16 %v161, %v157
    %v171 = vunpack.c.l.b16 %v163
    %v172 = vunpack.c.l.b16 %v164
    %v173 = vunpack.c.h.b16 %v163
    %v174 = vunpack.c.h.b16 %v164
    %v175 = vunpack.c.l.b16 %v165
    %v176 = vunpack.c.l.b16 %v166
    %v177 = vunpack.c.h.b16 %v165
    %v178 = vunpack.c.h.b16 %v166
    %v179 = vpack.c.b16 %v172, %v171
    %v180 = vpack.c.b16 %v174, %v173
    %v181 = vpack.c.b16 %v176, %v175
    %v182 = vpack.c.b16 %v178, %v177
    %vm187 = vcmask 1043456
    %vm188 = vcmask 523268
    %vm189 = vmor %vm188, %vm187
    %190 = vst.msk [vmem:[#allocation7] sm:$0xff] %vm189, %v179
    %191 = vst.msk [vmem:[#allocation7 + $0x8] sm:$0xff] %vm189, %v180
    %192 = vst.msk [vmem:[#allocation7 + $0x10] sm:$0xff] %vm189, %v181
    %193 = vst.msk [vmem:[#allocation7 + $0x18] sm:$0xff] %vm189, %v182
    // Predicated region
    $region18: #{tpu_custom_call.1} parent=1 // pred_check
      _
    $region19: #{tpu_custom_call.1} parent=1 // pred_check_branch
      %195 = sbr.rel (0) target = $region21
    $region20: #{tpu_custom_call.1} parent=1 // pred_region
      %s197 = ssub.s32 512, 512
      %198 = vsyncadd [#allocation4], %s197
      %s199 = sshll.u32 [#allocation7], 4
      %s200 = int_to_ptr.vmem [resolvable:$true] %s199
      %205 = dma.vmem_to_hbm [thread:$0]  %s200, 512, %s2, [#allocation4], 128, 128, 8
    $region21: #{tpu_custom_call.1} parent=1 // pred_fallthru
      _
    // Predicated region
    $region22: #{tpu_custom_call.1} parent=1 // pred_check
      _
    $region23: #{tpu_custom_call.1} parent=1 // pred_check_branch
      %207 = sbr.rel (0) target = $region25
    $region24: #{tpu_custom_call.1} parent=1 // pred_region
      %208 = dma.done [#allocation4], 512
    $region25: #{tpu_custom_call.1} parent=1 // pred_fallthru
      _
    %209 = vsyncpa [#allocation3], 1
    %210 = vsyncpa [#allocation6], 1
    %211 = vsyncpa [#allocation4], 1

</llo_original>
